<compile_context>
chip_gen: v7x
topology: tpu7x:2x2x1
jax: 0.10.0
libtpu: 0.0.40
codegen_flags: <defaults>
</compile_context>

<pallas_src>
import functools
import math

import jax
import jax.numpy as jnp
from jax.experimental import pallas as pl
from jax.experimental.pallas import tpu as pltpu


def _anomaly_attention_kernel(q_ref, k_ref, v_ref, sig_ref, mask_ref,
                              out_ref, series_ref, prior_ref, sig_out_ref,
                              *, scale):
    Lp, E = q_ref.shape
    Sp = k_ref.shape[0]

    q = q_ref[...] * scale            # fold scale into q: (Lp, E) VPU pass
    k = k_ref[...]                    # (Sp, E)
    v = v_ref[...]                    # (Sp, D)
    mask = mask_ref[...]              # (Lp, Sp), 1.0 == masked

    # scores = q . k^T  (einsum 'blhe,bshe->bhls' restricted to this (b, h)).
    scores = jax.lax.dot_general(
        q, k, (((1,), (1,)), ((), ())), preferred_element_type=jnp.float32)
    scores = jnp.where(mask > 0.5, -jnp.inf, scores)              # (Lp, Sp)

    # softmax over the key axis (dropout p = 0.0 -> identity).
    m = jnp.max(scores, axis=-1, keepdims=True)
    e = jnp.exp(scores - m)
    inv_denom = 1.0 / jnp.sum(e, axis=-1, keepdims=True)          # (Lp, 1)
    series = e * inv_denom                                        # (Lp, Sp)

    out_ref[...] = jnp.dot(series, v, preferred_element_type=jnp.float32)
    series_ref[...] = series

    # sigma pipeline: sigmoid(sigma * 5) + 1e-5 ; 3**sigma - 1.
    sig = sig_ref[...]                                  # (Lp, 1)
    sig = jax.nn.sigmoid(sig * 5.0) + 1e-5
    sig = jnp.exp(sig * math.log(3.0)) - 1.0            # == 3**sig - 1
    sig_out_ref[...] = sig                              # compact (Lp, 1) output

    # Gaussian prior from |i - j| distances (generated in-kernel, no DMA).
    ii = jax.lax.broadcasted_iota(jnp.int32, (Lp, Sp), 0)
    jj = jax.lax.broadcasted_iota(jnp.int32, (Lp, Sp), 1)
    dist = jnp.abs(ii - jj).astype(jnp.float32)

    inv_sig = 1.0 / sig                                 # per-row reciprocal
    coef = (1.0 / math.sqrt(2.0 * math.pi)) * inv_sig   # (Lp, 1)
    arg = -(dist * dist) * (0.5 * (inv_sig * inv_sig))  # lane-broadcast
    prior_ref[...] = coef * jnp.exp(arg)


def _round_up(x, m):
    return ((x + m - 1) // m) * m


def anomaly_attention(queries, keys, values, sigma, attn_mask,
                      scale=None, mask_flag=True):
    B, L, H, E = queries.shape
    _, S, _, D = values.shape
    scale = scale or (1.0 / math.sqrt(E))

    Lp = _round_up(L, 8)      # sublane multiple
    Sp = _round_up(S, 128)    # lane multiple -> unmasked vst on series/prior

    f32 = jnp.float32
    q = jnp.transpose(queries, (0, 2, 1, 3)).astype(f32)            # [B,H,L,E]
    k = jnp.transpose(keys, (0, 2, 1, 3)).astype(f32)               # [B,H,S,E]
    v = jnp.transpose(values, (0, 2, 1, 3)).astype(f32)             # [B,H,S,D]
    sig = jnp.transpose(sigma, (0, 2, 1))[..., None].astype(f32)    # [B,H,L,1]

    q = jnp.pad(q, ((0, 0), (0, 0), (0, Lp - L), (0, 0)))
    k = jnp.pad(k, ((0, 0), (0, 0), (0, Sp - S), (0, 0)))
    v = jnp.pad(v, ((0, 0), (0, 0), (0, Sp - S), (0, 0)))
    sig = jnp.pad(sig, ((0, 0), (0, 0), (0, Lp - L), (0, 0)))

    if mask_flag:
        mask = attn_mask.astype(f32)                    # [B, L, S], 1.0 == masked
    else:
        mask = jnp.zeros((B, L, S), f32)
    # Padded key columns / query rows are masked out.
    mask = jnp.pad(mask, ((0, 0), (0, Lp - L), (0, Sp - S)), constant_values=1.0)

    kernel = functools.partial(_anomaly_attention_kernel, scale=scale)

    out_shape = (
        jax.ShapeDtypeStruct((B, H, Lp, D), f32),    # V (per head)
        jax.ShapeDtypeStruct((B, H, Lp, Sp), f32),   # series (softmax attention)
        jax.ShapeDtypeStruct((B, H, Lp, Sp), f32),   # prior (Gaussian)
        jax.ShapeDtypeStruct((B, H, Lp, 1), f32),    # transformed sigma (compact)
    )

    V, series, prior, sig_rows = pl.pallas_call(
        kernel,
        out_shape=out_shape,
        grid_spec=pltpu.PrefetchScalarGridSpec(
            num_scalar_prefetch=0,
            grid=(B, H),                              # h is the fast (inner) axis
            in_specs=[
                pl.BlockSpec((None, None, Lp, E), lambda b, h: (b, h, 0, 0)),  # q
                pl.BlockSpec((None, None, Sp, E), lambda b, h: (b, h, 0, 0)),  # k
                pl.BlockSpec((None, None, Sp, D), lambda b, h: (b, h, 0, 0)),  # v
                pl.BlockSpec((None, None, Lp, 1), lambda b, h: (b, h, 0, 0)),  # sigma
                # Mask shared across heads: block index independent of h, so it
                # is DMA'd once per batch (no per-head re-fetch).
                pl.BlockSpec((None, Lp, Sp), lambda b, h: (b, 0, 0)),
            ],
            out_specs=[
                pl.BlockSpec((None, None, Lp, D), lambda b, h: (b, h, 0, 0)),
                pl.BlockSpec((None, None, Lp, Sp), lambda b, h: (b, h, 0, 0)),
                pl.BlockSpec((None, None, Lp, Sp), lambda b, h: (b, h, 0, 0)),
                pl.BlockSpec((None, None, Lp, 1), lambda b, h: (b, h, 0, 0)),
            ],
        ),
        compiler_params=pltpu.CompilerParams(
            dimension_semantics=("parallel", "parallel"),
            vmem_limit_bytes=32 * 1024 * 1024,
        ),
    )(q, k, v, sig, mask)

    # Un-pad and restore PyTorch output conventions.
    V = V[:, :, :L, :].transpose(0, 2, 1, 3)                         # [B, L, H, D]
    series = series[:, :, :L, :S]                                    # [B, H, L, S]
    prior = prior[:, :, :L, :S]                                      # [B, H, L, S]
    sigma_out = jnp.broadcast_to(sig_rows[:, :, :L, :], (B, H, L, S))
    return V, series, prior, sigma_out


def _reference(queries, keys, values, sigma, attn_mask, scale=None):
    """Pure-JAX mirror of the PyTorch forward (output_attention=True)."""
    B, L, H, E = queries.shape
    _, S, _, D = values.shape
    scale = scale or (1.0 / math.sqrt(E))
    scores = jnp.einsum('blhe,bshe->bhls', queries, keys)
    scores = jnp.where(attn_mask[:, None, :, :] > 0.5, -jnp.inf, scores)
    attn = scale * scores
    series = jax.nn.softmax(attn, axis=-1)
    V = jnp.einsum('bhls,bshd->blhd', series, values)
    sig = jnp.transpose(sigma, (0, 2, 1))
    sig = jax.nn.sigmoid(sig * 5.0) + 1e-5
    sig = 3.0 ** sig - 1.0
    sig = jnp.broadcast_to(sig[..., None], (B, H, L, S))
    ii = jnp.arange(L, dtype=jnp.float32)[:, None]
    jj = jnp.arange(S, dtype=jnp.float32)[None, :]
    dist = jnp.abs(ii - jj)
    prior = (1.0 / (math.sqrt(2.0 * math.pi) * sig)) * jnp.exp(
        -(dist ** 2) / (2.0 * sig ** 2))
    return V, series, prior, sig


if __name__ == "__main__":
    B, L, S, H, E, D = 2, 8, 8, 4, 32, 32   # win_size = 8
    key = jax.random.PRNGKey(0)
    kq, kk, kv, ks = jax.random.split(key, 4)
    queries = jax.random.normal(kq, (B, L, H, E), dtype=jnp.float32)
    keys_ = jax.random.normal(kk, (B, S, H, E), dtype=jnp.float32)
    values = jax.random.normal(kv, (B, S, H, D), dtype=jnp.float32)
    sigma = jax.random.normal(ks, (B, L, H), dtype=jnp.float32)
    # Triangular causal mask (mask_flag=True): masked where key index > query index.
    attn_mask = (jnp.arange(S)[None, :] > jnp.arange(L)[:, None]).astype(jnp.float32)
    attn_mask = jnp.broadcast_to(attn_mask, (B, L, S))

    outs = anomaly_attention(queries, keys_, values, sigma, attn_mask)
    outs = jax.block_until_ready(outs)

    refs = _reference(queries, keys_, values, sigma, attn_mask)
    for got, want in zip(outs, refs):
        assert got.shape == want.shape, (got.shape, want.shape)
        assert jnp.allclose(got, want, atol=1e-5, rtol=1e-4), float(
            jnp.max(jnp.abs(got - want)))

    print("KERNEL_OK")
</pallas_src>

<mosaic_0001>
module attributes {stable_mosaic.version = 11 : i64} {
  func.func @_anomaly_attention_kernel(%arg0: i32, %arg1: i32, %arg2: memref<1x1x8x32xf32, #tpu.memory_space<vmem>>, %arg3: memref<1x1x128x32xf32, #tpu.memory_space<vmem>>, %arg4: memref<1x1x128x32xf32, #tpu.memory_space<vmem>>, %arg5: memref<1x1x8x1xf32, #tpu.memory_space<vmem>>, %arg6: memref<1x8x128xf32, #tpu.memory_space<vmem>>, %arg7: memref<1x1x8x32xf32, #tpu.memory_space<vmem>>, %arg8: memref<1x1x8x128xf32, #tpu.memory_space<vmem>>, %arg9: memref<1x1x8x128xf32, #tpu.memory_space<vmem>>, %arg10: memref<1x1x8x1xf32, #tpu.memory_space<vmem>>) attributes {dimension_semantics = [#tpu.dimension_semantics<parallel>, #tpu.dimension_semantics<parallel>], iteration_bounds = array<i64: 2, 4>, scalar_prefetch = 0 : i64, scratch_operands = 0 : i64, tpu.core_type = #tpu.core_type<tc>, window_params = [{transform_indices = @transform_0, window_bounds = array<i64: 1, 1, 8, 32>}, {transform_indices = @transform_1, window_bounds = array<i64: 1, 1, 128, 32>}, {transform_indices = @transform_2, window_bounds = array<i64: 1, 1, 128, 32>}, {transform_indices = @transform_3, window_bounds = array<i64: 1, 1, 8, 1>}, {transform_indices = @transform_4, window_bounds = array<i64: 1, 8, 128>}, {transform_indices = @transform_5, window_bounds = array<i64: 1, 1, 8, 32>}, {transform_indices = @transform_6, window_bounds = array<i64: 1, 1, 8, 128>}, {transform_indices = @transform_7, window_bounds = array<i64: 1, 1, 8, 128>}, {transform_indices = @transform_8, window_bounds = array<i64: 1, 1, 8, 1>}]} {
    %c0 = arith.constant 0 : index
    %c0_0 = arith.constant 0 : index
    %c0_1 = arith.constant 0 : index
    %c0_2 = arith.constant 0 : index
    %0 = vector.load %arg2[%c0, %c0_0, %c0_1, %c0_2] : memref<1x1x8x32xf32, #tpu.memory_space<vmem>>, vector<1x1x8x32xf32>
    %1 = vector.shape_cast %0 : vector<1x1x8x32xf32> to vector<8x32xf32>
    %cst = arith.constant 0.176776692 : f32
    %2 = vector.broadcast %cst : f32 to vector<8x32xf32>
    %3 = arith.mulf %1, %2 : vector<8x32xf32>
    %c0_3 = arith.constant 0 : index
    %c0_4 = arith.constant 0 : index
    %c0_5 = arith.constant 0 : index
    %c0_6 = arith.constant 0 : index
    %4 = vector.load %arg3[%c0_3, %c0_4, %c0_5, %c0_6] : memref<1x1x128x32xf32, #tpu.memory_space<vmem>>, vector<1x1x128x32xf32>
    %5 = vector.shape_cast %4 : vector<1x1x128x32xf32> to vector<128x32xf32>
    %c0_7 = arith.constant 0 : index
    %c0_8 = arith.constant 0 : index
    %c0_9 = arith.constant 0 : index
    %c0_10 = arith.constant 0 : index
    %6 = vector.load %arg4[%c0_7, %c0_8, %c0_9, %c0_10] : memref<1x1x128x32xf32, #tpu.memory_space<vmem>>, vector<1x1x128x32xf32>
    %7 = vector.shape_cast %6 : vector<1x1x128x32xf32> to vector<128x32xf32>
    %c0_11 = arith.constant 0 : index
    %c0_12 = arith.constant 0 : index
    %c0_13 = arith.constant 0 : index
    %8 = vector.load %arg6[%c0_11, %c0_12, %c0_13] : memref<1x8x128xf32, #tpu.memory_space<vmem>>, vector<1x8x128xf32>
    %9 = vector.shape_cast %8 : vector<1x8x128xf32> to vector<8x128xf32>
    %cst_14 = arith.constant dense<0.000000e+00> : vector<8x128xf32>
    %10 = tpu.matmul %3, %5, %cst_14 {dimension_numbers = #tpu.dot_dimension_numbers<[1], [1], [0], [0], [0, 0, 1, 0], [], []>} : vector<8x32xf32>, vector<128x32xf32>, vector<8x128xf32> -> vector<8x128xf32>
    %cst_15 = arith.constant 5.000000e-01 : f32
    %11 = vector.broadcast %cst_15 : f32 to vector<8x128xf32>
    %12 = arith.cmpf ogt, %9, %11 : vector<8x128xf32>
    %cst_16 = arith.constant 0xFF800000 : f32
    %13 = vector.broadcast %cst_16 : f32 to vector<8x128xf32>
    %14 = arith.select %12, %13, %10 : vector<8x128xi1>, vector<8x128xf32>
    %cst_17 = arith.constant dense<0xFF800000> : vector<8xf32>
    %15 = vector.multi_reduction <maximumf>, %14, %cst_17 [1] : vector<8x128xf32> to vector<8xf32>
    %16 = vector.shape_cast %15 : vector<8xf32> to vector<8x1xf32>
    %17 = vector.broadcast %16 : vector<8x1xf32> to vector<8x128xf32>
    %18 = arith.subf %14, %17 : vector<8x128xf32>
    %19 = math.exp %18 : vector<8x128xf32>
    %cst_18 = arith.constant dense<0.000000e+00> : vector<8xf32>
    %20 = vector.multi_reduction <add>, %19, %cst_18 [1] : vector<8x128xf32> to vector<8xf32>
    %21 = vector.shape_cast %20 : vector<8xf32> to vector<8x1xf32>
    %cst_19 = arith.constant 1.000000e+00 : f32
    %22 = vector.broadcast %cst_19 : f32 to vector<8x1xf32>
    %23 = arith.divf %22, %21 : vector<8x1xf32>
    %24 = vector.broadcast %23 : vector<8x1xf32> to vector<8x128xf32>
    %25 = arith.mulf %19, %24 : vector<8x128xf32>
    %cst_20 = arith.constant dense<0.000000e+00> : vector<8x32xf32>
    %26 = tpu.matmul %25, %7, %cst_20 {dimension_numbers = #tpu.dot_dimension_numbers<[1], [0], [0], [1], [0, 0, 1, 1], [], []>} : vector<8x128xf32>, vector<128x32xf32>, vector<8x32xf32> -> vector<8x32xf32>
    %c0_21 = arith.constant 0 : index
    %c0_22 = arith.constant 0 : index
    %c0_23 = arith.constant 0 : index
    %c0_24 = arith.constant 0 : index
    %27 = vector.load %arg7[%c0_21, %c0_22, %c0_23, %c0_24] : memref<1x1x8x32xf32, #tpu.memory_space<vmem>>, vector<1x1x8x32xf32>
    %28 = vector.shape_cast %27 : vector<1x1x8x32xf32> to vector<8x32xf32>
    %29 = vector.shape_cast %26 : vector<8x32xf32> to vector<1x1x8x32xf32>
    tpu.vector_store %arg7[%c0_21, %c0_22, %c0_23, %c0_24], %29 {strides = array<i32>} : memref<1x1x8x32xf32, #tpu.memory_space<vmem>>, vector<1x1x8x32xf32>,
    %c0_25 = arith.constant 0 : index
    %c0_26 = arith.constant 0 : index
    %c0_27 = arith.constant 0 : index
    %c0_28 = arith.constant 0 : index
    %30 = vector.load %arg8[%c0_25, %c0_26, %c0_27, %c0_28] : memref<1x1x8x128xf32, #tpu.memory_space<vmem>>, vector<1x1x8x128xf32>
    %31 = vector.shape_cast %30 : vector<1x1x8x128xf32> to vector<8x128xf32>
    %32 = vector.shape_cast %25 : vector<8x128xf32> to vector<1x1x8x128xf32>
    tpu.vector_store %arg8[%c0_25, %c0_26, %c0_27, %c0_28], %32 {strides = array<i32>} : memref<1x1x8x128xf32, #tpu.memory_space<vmem>>, vector<1x1x8x128xf32>,
    %c0_29 = arith.constant 0 : index
    %c0_30 = arith.constant 0 : index
    %c0_31 = arith.constant 0 : index
    %c0_32 = arith.constant 0 : index
    %33 = vector.load %arg5[%c0_29, %c0_30, %c0_31, %c0_32] : memref<1x1x8x1xf32, #tpu.memory_space<vmem>>, vector<1x1x8x1xf32>
    %34 = vector.shape_cast %33 : vector<1x1x8x1xf32> to vector<8x1xf32>
    %cst_33 = arith.constant 5.000000e+00 : f32
    %35 = vector.broadcast %cst_33 : f32 to vector<8x1xf32>
    %36 = arith.mulf %34, %35 : vector<8x1xf32>
    %37 = arith.negf %36 : vector<8x1xf32>
    %38 = math.exp %37 : vector<8x1xf32>
    %cst_34 = arith.constant 1.000000e+00 : f32
    %39 = vector.broadcast %cst_34 : f32 to vector<8x1xf32>
    %40 = arith.addf %39, %38 : vector<8x1xf32>
    %41 = arith.divf %39, %40 : vector<8x1xf32>
    %cst_35 = arith.constant 9.99999974E-6 : f32
    %42 = vector.broadcast %cst_35 : f32 to vector<8x1xf32>
    %43 = arith.addf %41, %42 : vector<8x1xf32>
    %cst_36 = arith.constant 1.09861231 : f32
    %44 = vector.broadcast %cst_36 : f32 to vector<8x1xf32>
    %45 = arith.mulf %43, %44 : vector<8x1xf32>
    %46 = math.exp %45 : vector<8x1xf32>
    %cst_37 = arith.constant 1.000000e+00 : f32
    %47 = vector.broadcast %cst_37 : f32 to vector<8x1xf32>
    %48 = arith.subf %46, %47 : vector<8x1xf32>
    %c0_38 = arith.constant 0 : index
    %c0_39 = arith.constant 0 : index
    %c0_40 = arith.constant 0 : index
    %c0_41 = arith.constant 0 : index
    %49 = vector.load %arg10[%c0_38, %c0_39, %c0_40, %c0_41] : memref<1x1x8x1xf32, #tpu.memory_space<vmem>>, vector<1x1x8x1xf32>
    %50 = vector.shape_cast %49 : vector<1x1x8x1xf32> to vector<8x1xf32>
    %51 = vector.shape_cast %48 : vector<8x1xf32> to vector<1x1x8x1xf32>
    tpu.vector_store %arg10[%c0_38, %c0_39, %c0_40, %c0_41], %51 {strides = array<i32>} : memref<1x1x8x1xf32, #tpu.memory_space<vmem>>, vector<1x1x8x1xf32>,
    %52 = tpu.iota {dimensions = array<i32: 0>} : vector<8x128xi32>
    %53 = tpu.iota {dimensions = array<i32: 1>} : vector<8x128xi32>
    %54 = arith.subi %52, %53 : vector<8x128xi32>
    %55 = math.absi %54 : vector<8x128xi32>
    %56 = arith.sitofp %55 : vector<8x128xi32> to vector<8x128xf32>
    %cst_42 = arith.constant 1.000000e+00 : f32
    %57 = vector.broadcast %cst_42 : f32 to vector<8x1xf32>
    %58 = arith.divf %57, %48 : vector<8x1xf32>
    %cst_43 = arith.constant 0.398942292 : f32
    %59 = vector.broadcast %cst_43 : f32 to vector<8x1xf32>
    %60 = arith.mulf %59, %58 : vector<8x1xf32>
    %61 = arith.mulf %56, %56 : vector<8x128xf32>
    %cst_44 = arith.constant 0.000000e+00 : f32
    %62 = vector.broadcast %cst_44 : f32 to vector<8x128xf32>
    %63 = arith.subf %62, %61 : vector<8x128xf32>
    %64 = arith.mulf %58, %58 : vector<8x1xf32>
    %cst_45 = arith.constant 5.000000e-01 : f32
    %65 = vector.broadcast %cst_45 : f32 to vector<8x1xf32>
    %66 = arith.mulf %65, %64 : vector<8x1xf32>
    %67 = vector.broadcast %66 : vector<8x1xf32> to vector<8x128xf32>
    %68 = arith.mulf %63, %67 : vector<8x128xf32>
    %69 = math.exp %68 : vector<8x128xf32>
    %70 = vector.broadcast %60 : vector<8x1xf32> to vector<8x128xf32>
    %71 = arith.mulf %70, %69 : vector<8x128xf32>
    %c0_46 = arith.constant 0 : index
    %c0_47 = arith.constant 0 : index
    %c0_48 = arith.constant 0 : index
    %c0_49 = arith.constant 0 : index
    %72 = vector.load %arg9[%c0_46, %c0_47, %c0_48, %c0_49] : memref<1x1x8x128xf32, #tpu.memory_space<vmem>>, vector<1x1x8x128xf32>
    %73 = vector.shape_cast %72 : vector<1x1x8x128xf32> to vector<8x128xf32>
    %74 = vector.shape_cast %71 : vector<8x128xf32> to vector<1x1x8x128xf32>
    tpu.vector_store %arg9[%c0_46, %c0_47, %c0_48, %c0_49], %74 {strides = array<i32>} : memref<1x1x8x128xf32, #tpu.memory_space<vmem>>, vector<1x1x8x128xf32>,
    return
  }
  func.func @transform_0(%arg0: i32, %arg1: i32) -> (i32, i32, i32, i32) {
    %c0_i32 = arith.constant 0 : i32
    %c0_i32_0 = arith.constant 0 : i32
    %c0_i32_1 = arith.constant 0 : i32
    return %arg0, %arg1, %c0_i32, %c0_i32_0 : i32, i32, i32, i32
  }
  func.func @transform_1(%arg0: i32, %arg1: i32) -> (i32, i32, i32, i32) {
    %c0_i32 = arith.constant 0 : i32
    %c0_i32_0 = arith.constant 0 : i32
    %c0_i32_1 = arith.constant 0 : i32
    return %arg0, %arg1, %c0_i32, %c0_i32_0 : i32, i32, i32, i32
  }
  func.func @transform_2(%arg0: i32, %arg1: i32) -> (i32, i32, i32, i32) {
    %c0_i32 = arith.constant 0 : i32
    %c0_i32_0 = arith.constant 0 : i32
    %c0_i32_1 = arith.constant 0 : i32
    return %arg0, %arg1, %c0_i32, %c0_i32_0 : i32, i32, i32, i32
  }
  func.func @transform_3(%arg0: i32, %arg1: i32) -> (i32, i32, i32, i32) {
    %c0_i32 = arith.constant 0 : i32
    %c0_i32_0 = arith.constant 0 : i32
    %c0_i32_1 = arith.constant 0 : i32
    return %arg0, %arg1, %c0_i32, %c0_i32_0 : i32, i32, i32, i32
  }
  func.func @transform_4(%arg0: i32, %arg1: i32) -> (i32, i32, i32) {
    %c0_i32 = arith.constant 0 : i32
    %c0_i32_0 = arith.constant 0 : i32
    %c0_i32_1 = arith.constant 0 : i32
    return %arg0, %c0_i32, %c0_i32_0 : i32, i32, i32
  }
  func.func @transform_5(%arg0: i32, %arg1: i32) -> (i32, i32, i32, i32) {
    %c0_i32 = arith.constant 0 : i32
    %c0_i32_0 = arith.constant 0 : i32
    %c0_i32_1 = arith.constant 0 : i32
    return %arg0, %arg1, %c0_i32, %c0_i32_0 : i32, i32, i32, i32
  }
  func.func @transform_6(%arg0: i32, %arg1: i32) -> (i32, i32, i32, i32) {
    %c0_i32 = arith.constant 0 : i32
    %c0_i32_0 = arith.constant 0 : i32
    %c0_i32_1 = arith.constant 0 : i32
    return %arg0, %arg1, %c0_i32, %c0_i32_0 : i32, i32, i32, i32
  }
  func.func @transform_7(%arg0: i32, %arg1: i32) -> (i32, i32, i32, i32) {
    %c0_i32 = arith.constant 0 : i32
    %c0_i32_0 = arith.constant 0 : i32
    %c0_i32_1 = arith.constant 0 : i32
    return %arg0, %arg1, %c0_i32, %c0_i32_0 : i32, i32, i32, i32
  }
  func.func @transform_8(%arg0: i32, %arg1: i32) -> (i32, i32, i32, i32) {
    %c0_i32 = arith.constant 0 : i32
    %c0_i32_0 = arith.constant 0 : i32
    %c0_i32_1 = arith.constant 0 : i32
    return %arg0, %arg1, %c0_i32, %c0_i32_0 : i32, i32, i32, i32
  }
}

</mosaic_0001>

<llo_original>
// kernel: tpu_custom_call.1
$region0: #{tpu_custom_call.1}
  #allocation0 [shape = 'u32[]', space=smem, size = 0x4, offset = 0x4, fixed_abs, tag = 'smem constant byte address 0x4 - core index']
  #allocation1 [shape = 'u32[144,128]{1,0:T(1,128)}', space=vmem, size = 0x12000, scoped, tag = 'internal scratch']
  %s0 = inlined_call_operand.vmem [shape: f32[2,4,8,32], index: 0, kind: input, shape index: {}]
  %s1 = inlined_call_operand.vmem [shape: f32[2,4,128,32], index: 1, kind: input, shape index: {}]
  %s2 = inlined_call_operand.vmem [shape: f32[2,4,128,32], index: 2, kind: input, shape index: {}]
  %s3 = inlined_call_operand.vmem [shape: f32[2,4,8,1], index: 3, kind: input, shape index: {}]
  %s4 = inlined_call_operand.vmem [shape: f32[2,8,128], index: 4, kind: input, shape index: {}]
  %s5 = inlined_call_operand.hbm [shape: f32[2,4,8,32], index: 5, kind: output, shape index: {0}]
  %s6 = inlined_call_operand.hbm [shape: f32[2,4,8,128], index: 6, kind: output, shape index: {1}]
  %s7 = inlined_call_operand.hbm [shape: f32[2,4,8,128], index: 7, kind: output, shape index: {2}]
  %s8 = inlined_call_operand.vmem [shape: f32[2,4,8,1], index: 8, kind: output, shape index: {3}]
  %9 = xla_tuple %s5, %s6, %s7, %s8
  %s10 = sld [smem:[#allocation0]]
  $region77: #{tpu_custom_call.1} parent=0
    _
  %s12 = ssub.s32 1, %s10
  %s13 = scalar_select 0, %s12, %s10
  $region1: #{tpu_custom_call.1} parent=0
    #allocation2 [shape = 'u8[8192]{0}', space=vmem, size = 0x2000, scoped, tag = 'output window, operand 0']
    #allocation3 [shape = 's32[2]{0}', space=sflag, size = 0x8, scoped, tag = 'scoped memory for tpu_custom_call.1']
    #allocation4 [shape = 'u8[8192]{0}', space=vmem, size = 0x2000, scoped, tag = 'output window, operand 1']
    #allocation5 [shape = 's32[2]{0}', space=sflag, size = 0x8, scoped, tag = 'scoped memory for tpu_custom_call.1']
    #allocation6 [shape = 'u8[8192]{0}', space=vmem, size = 0x2000, scoped, tag = 'output window, operand 2']
    %14 = vsyncpa [#allocation3], 0
    %s15 = scalar_lea.sflag [#allocation3], 1
    %16 = vsyncpa %s15, 0
    %17 = vsyncpa [#allocation5], 0
    %s18 = scalar_lea.sflag [#allocation5], 1
    %19 = vsyncpa %s18, 0
    loop: start=0, step=1, limit=10
    $region2: #{tpu_custom_call.1} parent=1 // loop_pre_header
      _
    $region3: #{tpu_custom_call.1} parent=1 // loop_header
      %s21 = sphi 0, %s25
      %p22 = scmp.ge.s32.totalorder %s21, 10
      %s28 = sphi 0, %s40
      %s29 = sphi 0, %s36
      %s30 = sphi 0, %s28
      %s31 = sphi 0, %s29
      %s32 = sphi 0, %s30
      %s33 = sphi 0, %s31
      %s45 = sphi 0, %s47
      %s48 = sphi 0, %s45
      %s49 = sphi 0, %s48
      %s65 = sphi 0, %s49
      %s73 = sphi 0, %s75
      %s76 = sphi 0, %s73
      %s77 = sphi 0, %s76
      %s93 = sphi 0, %s77
      %s101 = sphi 0, %s103
      %s104 = sphi 0, %s101
      %s105 = sphi 0, %s104
      %s121 = sphi 0, %s105
      %s129 = sphi 0, %s131
      %s132 = sphi 0, %s129
      %s133 = sphi 0, %s132
      %s149 = sphi 0, %s133
      %s155 = sphi 0, %s157
      %s158 = sphi 0, %s155
      %s159 = sphi 0, %s158
      %s175 = sphi 0, %s159
      %s183 = sphi 0, %s185
      %s186 = sphi 0, %s183
      %s187 = sphi 0, %s186
      %s203 = sphi 0, %s187
      %s211 = sphi 0, %s213
      %s214 = sphi 0, %s211
      %s215 = sphi 0, %s214
      %s231 = sphi 0, %s215
      %s239 = sphi 0, %s241
      %s242 = sphi 0, %s239
      %s243 = sphi 0, %s242
      %s259 = sphi 0, %s243
      %s267 = sphi 0, %s269
      %s270 = sphi 0, %s267
      %s271 = sphi 0, %s270
      %s287 = sphi 0, %s271
    $region4: #{tpu_custom_call.1} parent=1 // loop_header_branch
      %24 = sbr.rel (%p22) target = $region8
    $region5: #{tpu_custom_call.1} parent=1 // loop_body
      %s26 = ssub.s32 %s21, 1
      %s27 = ssub.s32 %s21, 2
      %s34 = sadd.s32 1, %s29
      %p35 = scmp.ge.s32.totalorder %s34, 4
      %s36 = scalar_select %p35, 0, %s34
      %s37 = sadd.s32 1, %s28
      %s38 = scalar_select %p35, %s37, %s28
      %p39 = scmp.ge.s32.totalorder %s38, 2
      %s40 = scalar_select %p39, 0, %s38
      %s41 = ssub.s32 %s28, %s40
      %s42 = ssub.s32 %s29, %s36
      %s43 = sor.u32 %s41, %s42
      %p44 = scmp.eq.s32.totalorder %s43, 0
      %s46 = sadd.s32 %s45, 1
      %s47 = scalar_select %p44, %s45, %s46
      %p50 = pneg %p44
      %p51 = scmp.eq.s32.totalorder %s21, 7
      %p52 = por %p50, %p51
      %p53 = scmp.ne.s32.totalorder %s45, %s48
      %p54 = scmp.eq.s32.totalorder %s21, 0
      %p55 = por %p53, %p54
      %p56 = scmp.ne.s32.totalorder %s45, %s48
      %p57 = scmp.eq.s32.totalorder %s26, 7
      %p58 = por %p56, %p57
      %p59 = scmp.ne.s32.totalorder %s48, %s49
      %p60 = scmp.eq.s32.totalorder %s26, 0
      %p61 = por %p59, %p60
      %p62 = scmp.ne.s32.totalorder %s48, %s49
      %p63 = scmp.eq.s32.totalorder %s27, 7
      %p64 = por %p62, %p63
      %p66 = scmp.ne.s32.totalorder %s49, %s65
      %p67 = scmp.eq.s32.totalorder %s27, 0
      %p68 = por %p66, %p67
      %s69 = ssub.s32 %s28, %s40
      %s70 = ssub.s32 %s29, %s36
      %s71 = sor.u32 %s69, %s70
      %p72 = scmp.eq.s32.totalorder %s71, 0
      %s74 = sadd.s32 %s73, 1
      %s75 = scalar_select %p72, %s73, %s74
      %p78 = pneg %p72
      %p79 = scmp.eq.s32.totalorder %s21, 7
      %p80 = por %p78, %p79
      %p81 = scmp.ne.s32.totalorder %s73, %s76
      %p82 = scmp.eq.s32.totalorder %s21, 0
      %p83 = por %p81, %p82
      %p84 = scmp.ne.s32.totalorder %s73, %s76
      %p85 = scmp.eq.s32.totalorder %s26, 7
      %p86 = por %p84, %p85
      %p87 = scmp.ne.s32.totalorder %s76, %s77
      %p88 = scmp.eq.s32.totalorder %s26, 0
      %p89 = por %p87, %p88
      %p90 = scmp.ne.s32.totalorder %s76, %s77
      %p91 = scmp.eq.s32.totalorder %s27, 7
      %p92 = por %p90, %p91
      %p94 = scmp.ne.s32.totalorder %s77, %s93
      %p95 = scmp.eq.s32.totalorder %s27, 0
      %p96 = por %p94, %p95
      %s97 = ssub.s32 %s28, %s40
      %s98 = ssub.s32 %s29, %s36
      %s99 = sor.u32 %s97, %s98
      %p100 = scmp.eq.s32.totalorder %s99, 0
      %s102 = sadd.s32 %s101, 1
      %s103 = scalar_select %p100, %s101, %s102
      %p106 = pneg %p100
      %p107 = scmp.eq.s32.totalorder %s21, 7
      %p108 = por %p106, %p107
      %p109 = scmp.ne.s32.totalorder %s101, %s104
      %p110 = scmp.eq.s32.totalorder %s21, 0
      %p111 = por %p109, %p110
      %p112 = scmp.ne.s32.totalorder %s101, %s104
      %p113 = scmp.eq.s32.totalorder %s26, 7
      %p114 = por %p112, %p113
      %p115 = scmp.ne.s32.totalorder %s104, %s105
      %p116 = scmp.eq.s32.totalorder %s26, 0
      %p117 = por %p115, %p116
      %p118 = scmp.ne.s32.totalorder %s104, %s105
      %p119 = scmp.eq.s32.totalorder %s27, 7
      %p120 = por %p118, %p119
      %p122 = scmp.ne.s32.totalorder %s105, %s121
      %p123 = scmp.eq.s32.totalorder %s27, 0
      %p124 = por %p122, %p123
      %s125 = ssub.s32 %s28, %s40
      %s126 = ssub.s32 %s29, %s36
      %s127 = sor.u32 %s125, %s126
      %p128 = scmp.eq.s32.totalorder %s127, 0
      %s130 = sadd.s32 %s129, 1
      %s131 = scalar_select %p128, %s129, %s130
      %p134 = pneg %p128
      %p135 = scmp.eq.s32.totalorder %s21, 7
      %p136 = por %p134, %p135
      %p137 = scmp.ne.s32.totalorder %s129, %s132
      %p138 = scmp.eq.s32.totalorder %s21, 0
      %p139 = por %p137, %p138
      %p140 = scmp.ne.s32.totalorder %s129, %s132
      %p141 = scmp.eq.s32.totalorder %s26, 7
      %p142 = por %p140, %p141
      %p143 = scmp.ne.s32.totalorder %s132, %s133
      %p144 = scmp.eq.s32.totalorder %s26, 0
      %p145 = por %p143, %p144
      %p146 = scmp.ne.s32.totalorder %s132, %s133
      %p147 = scmp.eq.s32.totalorder %s27, 7
      %p148 = por %p146, %p147
      %p150 = scmp.ne.s32.totalorder %s133, %s149
      %p151 = scmp.eq.s32.totalorder %s27, 0
      %p152 = por %p150, %p151
      %s153 = ssub.s32 %s28, %s40
      %p154 = scmp.eq.s32.totalorder %s153, 0
      %s156 = sadd.s32 %s155, 1
      %s157 = scalar_select %p154, %s155, %s156
      %p160 = pneg %p154
      %p161 = scmp.eq.s32.totalorder %s21, 7
      %p162 = por %p160, %p161
      %p163 = scmp.ne.s32.totalorder %s155, %s158
      %p164 = scmp.eq.s32.totalorder %s21, 0
      %p165 = por %p163, %p164
      %p166 = scmp.ne.s32.totalorder %s155, %s158
      %p167 = scmp.eq.s32.totalorder %s26, 7
      %p168 = por %p166, %p167
      %p169 = scmp.ne.s32.totalorder %s158, %s159
      %p170 = scmp.eq.s32.totalorder %s26, 0
      %p171 = por %p169, %p170
      %p172 = scmp.ne.s32.totalorder %s158, %s159
      %p173 = scmp.eq.s32.totalorder %s27, 7
      %p174 = por %p172, %p173
      %p176 = scmp.ne.s32.totalorder %s159, %s175
      %p177 = scmp.eq.s32.totalorder %s27, 0
      %p178 = por %p176, %p177
      %s179 = ssub.s32 %s28, %s40
      %s180 = ssub.s32 %s29, %s36
      %s181 = sor.u32 %s179, %s180
      %p182 = scmp.eq.s32.totalorder %s181, 0
      %s184 = sadd.s32 %s183, 1
      %s185 = scalar_select %p182, %s183, %s184
      %p188 = pneg %p182
      %p189 = scmp.eq.s32.totalorder %s21, 7
      %p190 = por %p188, %p189
      %p191 = scmp.ne.s32.totalorder %s183, %s186
      %p192 = scmp.eq.s32.totalorder %s21, 0
      %p193 = por %p191, %p192
      %p194 = scmp.ne.s32.totalorder %s183, %s186
      %p195 = scmp.eq.s32.totalorder %s26, 7
      %p196 = por %p194, %p195
      %p197 = scmp.ne.s32.totalorder %s186, %s187
      %p198 = scmp.eq.s32.totalorder %s26, 0
      %p199 = por %p197, %p198
      %p200 = scmp.ne.s32.totalorder %s186, %s187
      %p201 = scmp.eq.s32.totalorder %s27, 7
      %p202 = por %p200, %p201
      %p204 = scmp.ne.s32.totalorder %s187, %s203
      %p205 = scmp.eq.s32.totalorder %s27, 0
      %p206 = por %p204, %p205
      %s207 = ssub.s32 %s28, %s40
      %s208 = ssub.s32 %s29, %s36
      %s209 = sor.u32 %s207, %s208
      %p210 = scmp.eq.s32.totalorder %s209, 0
      %s212 = sadd.s32 %s211, 1
      %s213 = scalar_select %p210, %s211, %s212
      %p216 = pneg %p210
      %p217 = scmp.eq.s32.totalorder %s21, 7
      %p218 = por %p216, %p217
      %p219 = scmp.ne.s32.totalorder %s211, %s214
      %p220 = scmp.eq.s32.totalorder %s21, 0
      %p221 = por %p219, %p220
      %p222 = scmp.ne.s32.totalorder %s211, %s214
      %p223 = scmp.eq.s32.totalorder %s26, 7
      %p224 = por %p222, %p223
      %p225 = scmp.ne.s32.totalorder %s214, %s215
      %p226 = scmp.eq.s32.totalorder %s26, 0
      %p227 = por %p225, %p226
      %p228 = scmp.ne.s32.totalorder %s214, %s215
      %p229 = scmp.eq.s32.totalorder %s27, 7
      %p230 = por %p228, %p229
      %p232 = scmp.ne.s32.totalorder %s215, %s231
      %p233 = scmp.eq.s32.totalorder %s27, 0
      %p234 = por %p232, %p233
      %s235 = ssub.s32 %s28, %s40
      %s236 = ssub.s32 %s29, %s36
      %s237 = sor.u32 %s235, %s236
      %p238 = scmp.eq.s32.totalorder %s237, 0
      %s240 = sadd.s32 %s239, 1
      %s241 = scalar_select %p238, %s239, %s240
      %p244 = pneg %p238
      %p245 = scmp.eq.s32.totalorder %s21, 7
      %p246 = por %p244, %p245
      %p247 = scmp.ne.s32.totalorder %s239, %s242
      %p248 = scmp.eq.s32.totalorder %s21, 0
      %p249 = por %p247, %p248
      %p250 = scmp.ne.s32.totalorder %s239, %s242
      %p251 = scmp.eq.s32.totalorder %s26, 7
      %p252 = por %p250, %p251
      %p253 = scmp.ne.s32.totalorder %s242, %s243
      %p254 = scmp.eq.s32.totalorder %s26, 0
      %p255 = por %p253, %p254
      %p256 = scmp.ne.s32.totalorder %s242, %s243
      %p257 = scmp.eq.s32.totalorder %s27, 7
      %p258 = por %p256, %p257
      %p260 = scmp.ne.s32.totalorder %s243, %s259
      %p261 = scmp.eq.s32.totalorder %s27, 0
      %p262 = por %p260, %p261
      %s263 = ssub.s32 %s28, %s40
      %s264 = ssub.s32 %s29, %s36
      %s265 = sor.u32 %s263, %s264
      %p266 = scmp.eq.s32.totalorder %s265, 0
      %s268 = sadd.s32 %s267, 1
      %s269 = scalar_select %p266, %s267, %s268
      %p272 = pneg %p266
      %p273 = scmp.eq.s32.totalorder %s21, 7
      %p274 = por %p272, %p273
      %p275 = scmp.ne.s32.totalorder %s267, %s270
      %p276 = scmp.eq.s32.totalorder %s21, 0
      %p277 = por %p275, %p276
      %p278 = scmp.ne.s32.totalorder %s267, %s270
      %p279 = scmp.eq.s32.totalorder %s26, 7
      %p280 = por %p278, %p279
      %p281 = scmp.ne.s32.totalorder %s270, %s271
      %p282 = scmp.eq.s32.totalorder %s26, 0
      %p283 = por %p281, %p282
      %p284 = scmp.ne.s32.totalorder %s270, %s271
      %p285 = scmp.eq.s32.totalorder %s27, 7
      %p286 = por %p284, %p285
      %p288 = scmp.ne.s32.totalorder %s271, %s287
      %p289 = scmp.eq.s32.totalorder %s27, 0
      %p290 = por %p288, %p289
      %p291 = scmp.le.s32.totalorder 1, %s21
      %p292 = scmp.lt.s32.totalorder %s21, 9
      %p293 = pnand %p291, %p292
      %p294 = pneg %p293
      // Predicated region
      $region9: #{tpu_custom_call.1} parent=5 // pred_check
        _
      $region10: #{tpu_custom_call.1} parent=5 // pred_check_branch
        %296 = sbr.rel (%p293) target = $region12
      $region11: #{tpu_custom_call.1} parent=5 // pred_region
        %s297 = ssub.s32 %s21, 1
      $region12: #{tpu_custom_call.1} parent=5 // pred_fallthru
        _
      %p298 = scmp.lt.s32.totalorder %s21, 8
      // Predicated region
      $region13: #{tpu_custom_call.1} parent=5 // pred_check
        %p299 = pneg %p298
      $region14: #{tpu_custom_call.1} parent=5 // pred_check_branch
        %301 = sbr.rel (%p299) target = $region16
      $region15: #{tpu_custom_call.1} parent=5 // pred_region
        // Predicated region
        $region17: #{tpu_custom_call.1} parent=15 // pred_check
          %p302 = pneg %p55
        $region18: #{tpu_custom_call.1} parent=15 // pred_check_branch
          %304 = sbr.rel (%p302) target = $region20
        $region19: #{tpu_custom_call.1} parent=15 // pred_region
          %p305 = scmp.lt.s32.totalorder %s28, 1
          %s306 = scalar_select %p305, %s28, 1
          %p307 = scmp.lt.s32.totalorder %s29, 3
          %s308 = scalar_select %p307, %s29, 3
          %s309 = smul.addr %s306, 4
          %s310 = sadd.s32 %s308, %s309
          %s311 = smul.addr %s310, 8
          %s312 = scalar_lea.vmem %s0, %s311
        $region20: #{tpu_custom_call.1} parent=15 // pred_fallthru
          _
        // Predicated region
        $region21: #{tpu_custom_call.1} parent=15 // pred_check
          %p313 = pneg %p83
        $region22: #{tpu_custom_call.1} parent=15 // pred_check_branch
          %315 = sbr.rel (%p313) target = $region24
        $region23: #{tpu_custom_call.1} parent=15 // pred_region
          %p316 = scmp.lt.s32.totalorder %s28, 1
          %s317 = scalar_select %p316, %s28, 1
          %p318 = scmp.lt.s32.totalorder %s29, 3
          %s319 = scalar_select %p318, %s29, 3
          %s320 = smul.addr %s319, 16
          %s321 = smul.addr %s317, 64
          %s322 = sadd.s32 %s320, %s321
          %s323 = smul.addr %s322, 8
          %s324 = scalar_lea.vmem %s1, %s323
        $region24: #{tpu_custom_call.1} parent=15 // pred_fallthru
          _
        // Predicated region
        $region25: #{tpu_custom_call.1} parent=15 // pred_check
          %p325 = pneg %p111
        $region26: #{tpu_custom_call.1} parent=15 // pred_check_branch
          %327 = sbr.rel (%p325) target = $region28
        $region27: #{tpu_custom_call.1} parent=15 // pred_region
          %p328 = scmp.lt.s32.totalorder %s28, 1
          %s329 = scalar_select %p328, %s28, 1
          %p330 = scmp.lt.s32.totalorder %s29, 3
          %s331 = scalar_select %p330, %s29, 3
          %s332 = smul.addr %s331, 16
          %s333 = smul.addr %s329, 64
          %s334 = sadd.s32 %s332, %s333
          %s335 = smul.addr %s334, 8
          %s336 = scalar_lea.vmem %s2, %s335
        $region28: #{tpu_custom_call.1} parent=15 // pred_fallthru
          _
        // Predicated region
        $region29: #{tpu_custom_call.1} parent=15 // pred_check
          %p337 = pneg %p139
        $region30: #{tpu_custom_call.1} parent=15 // pred_check_branch
          %339 = sbr.rel (%p337) target = $region32
        $region31: #{tpu_custom_call.1} parent=15 // pred_region
          %p340 = scmp.lt.s32.totalorder %s28, 1
          %s341 = scalar_select %p340, %s28, 1
          %p342 = scmp.lt.s32.totalorder %s29, 3
          %s343 = scalar_select %p342, %s29, 3
          %s344 = smul.addr %s341, 4
          %s345 = sadd.s32 %s343, %s344
          %s346 = smul.addr %s345, 8
          %s347 = scalar_lea.vmem %s3, %s346
        $region32: #{tpu_custom_call.1} parent=15 // pred_fallthru
          _
        // Predicated region
        $region33: #{tpu_custom_call.1} parent=15 // pred_check
          %p348 = pneg %p165
        $region34: #{tpu_custom_call.1} parent=15 // pred_check_branch
          %350 = sbr.rel (%p348) target = $region36
        $region35: #{tpu_custom_call.1} parent=15 // pred_region
          %p351 = scmp.lt.s32.totalorder %s28, 1
          %s352 = scalar_select %p351, %s28, 1
          %s353 = smul.addr %s352, 8
          %s354 = scalar_lea.vmem %s4, %s353
        $region36: #{tpu_custom_call.1} parent=15 // pred_fallthru
          _
      $region16: #{tpu_custom_call.1} parent=5 // pred_fallthru
        _
      %p355 = scmp.le.s32.totalorder 1, %s21
      %p356 = scmp.lt.s32.totalorder %s21, 9
      %p357 = pnand %p355, %p356
      %p358 = pneg %p357
      // Predicated region
      $region37: #{tpu_custom_call.1} parent=5 // pred_check
        _
      $region38: #{tpu_custom_call.1} parent=5 // pred_check_branch
        %360 = sbr.rel (%p357) target = $region40
      $region39: #{tpu_custom_call.1} parent=5 // pred_region
        %s361 = ssub.s32 %s21, 1
        %p362 = scmp.lt.s32.totalorder %s30, 1
        %s363 = scalar_select %p362, %s30, 1
        %p364 = scmp.lt.s32.totalorder %s31, 3
        %s365 = scalar_select %p364, %s31, 3
        %s366 = smul.addr %s363, 4
        %s367 = sadd.s32 %s365, %s366
        %s368 = smul.addr %s367, 8
        %s369 = scalar_lea.vmem %s0, %s368
        %p370 = pneg %p61
        %p371 = pneg %p58
        %p372 = scmp.lt.s32.totalorder %s30, 1
        %s373 = scalar_select %p372, %s30, 1
        %p374 = scmp.lt.s32.totalorder %s31, 3
        %s375 = scalar_select %p374, %s31, 3
        %s376 = smul.addr %s375, 16
        %s377 = smul.addr %s373, 64
        %s378 = sadd.s32 %s376, %s377
        %s379 = smul.addr %s378, 8
        %s380 = scalar_lea.vmem %s1, %s379
        %p381 = pneg %p89
        %p382 = pneg %p86
        %p383 = scmp.lt.s32.totalorder %s30, 1
        %s384 = scalar_select %p383, %s30, 1
        %p385 = scmp.lt.s32.totalorder %s31, 3
        %s386 = scalar_select %p385, %s31, 3
        %s387 = smul.addr %s386, 16
        %s388 = smul.addr %s384, 64
        %s389 = sadd.s32 %s387, %s388
        %s390 = smul.addr %s389, 8
        %s391 = scalar_lea.vmem %s2, %s390
        %p392 = pneg %p117
        %p393 = pneg %p114
        %p394 = scmp.lt.s32.totalorder %s30, 1
        %s395 = scalar_select %p394, %s30, 1
        %p396 = scmp.lt.s32.totalorder %s31, 3
        %s397 = scalar_select %p396, %s31, 3
        %s398 = smul.addr %s395, 4
        %s399 = sadd.s32 %s397, %s398
        %s400 = smul.addr %s399, 8
        %s401 = scalar_lea.vmem %s3, %s400
        %p402 = pneg %p145
        %p403 = pneg %p142
        %p404 = scmp.lt.s32.totalorder %s30, 1
        %s405 = scalar_select %p404, %s30, 1
        %s406 = smul.addr %s405, 8
        %s407 = scalar_lea.vmem %s4, %s406
        %p408 = pneg %p171
        %p409 = pneg %p168
        %p410 = pneg %p199
        %p411 = pneg %p196
        %s412 = sand.u32 %s186, 1
        %s413 = scalar_lea.sflag [#allocation3], %s412
        %s414 = sand.u32 %s186, 1
        %s415 = smul.addr %s414, 8
        %s416 = scalar_lea.vmem [#allocation2], %s415
        %p417 = pneg %p227
        %p418 = pneg %p224
        %s419 = sand.u32 %s26, 1
        %s420 = scalar_lea.sflag [#allocation5], %s419
        %s421 = sand.u32 %s214, 1
        %s422 = smul.addr %s421, 8
        %s423 = scalar_lea.vmem [#allocation4], %s422
        %p424 = pneg %p255
        %p425 = pneg %p252
        %s426 = sand.u32 %s26, 1
        %s427 = scalar_lea.sflag [#allocation5], %s426
        %s428 = sand.u32 %s242, 1
        %s429 = smul.addr %s428, 8
        %s430 = scalar_lea.vmem [#allocation6], %s429
        %p431 = pneg %p283
        %p432 = pneg %p280
        %p433 = scmp.lt.s32.totalorder %s30, 1
        %s434 = scalar_select %p433, %s30, 1
        %p435 = scmp.lt.s32.totalorder %s31, 3
        %s436 = scalar_select %p435, %s31, 3
        %s437 = smul.addr %s434, 4
        %s438 = sadd.s32 %s436, %s437
        %s439 = smul.addr %s438, 8
        %s440 = scalar_lea.vmem %s8, %s439
        %p441 = scmp.lt.s32.totalorder %s30, 1
        %s442 = scalar_select %p441, %s30, 1
        %p443 = scmp.lt.s32.totalorder %s31, 3
        %s444 = scalar_select %p443, %s31, 3
        %s445 = smul.addr %s442, 4
        %s446 = sadd.s32 %s444, %s445
        %s447 = smul.addr %s446, 8
        %s448 = scalar_lea.vmem %s0, %s447
        %p449 = scmp.lt.s32.totalorder %s30, 1
        %s450 = scalar_select %p449, %s30, 1
        %p451 = scmp.lt.s32.totalorder %s31, 3
        %s452 = scalar_select %p451, %s31, 3
        %s453 = smul.addr %s452, 16
        %s454 = smul.addr %s450, 64
        %s455 = sadd.s32 %s453, %s454
        %s456 = smul.addr %s455, 8
        %s457 = scalar_lea.vmem %s1, %s456
        %p458 = scmp.lt.s32.totalorder %s30, 1
        %s459 = scalar_select %p458, %s30, 1
        %p460 = scmp.lt.s32.totalorder %s31, 3
        %s461 = scalar_select %p460, %s31, 3
        %s462 = smul.addr %s461, 16
        %s463 = smul.addr %s459, 64
        %s464 = sadd.s32 %s462, %s463
        %s465 = smul.addr %s464, 8
        %s466 = scalar_lea.vmem %s2, %s465
        %p467 = scmp.lt.s32.totalorder %s30, 1
        %s468 = scalar_select %p467, %s30, 1
        %p469 = scmp.lt.s32.totalorder %s31, 3
        %s470 = scalar_select %p469, %s31, 3
        %s471 = smul.addr %s468, 4
        %s472 = sadd.s32 %s470, %s471
        %s473 = smul.addr %s472, 8
        %s474 = scalar_lea.vmem %s3, %s473
        %p475 = scmp.lt.s32.totalorder %s30, 1
        %s476 = scalar_select %p475, %s30, 1
        %s477 = smul.addr %s476, 8
        %s478 = scalar_lea.vmem %s4, %s477
        %p479 = scmp.lt.s32.totalorder %s30, 1
        %s480 = scalar_select %p479, %s30, 1
        %p481 = scmp.lt.s32.totalorder %s31, 3
        %s482 = scalar_select %p481, %s31, 3
        %s483 = smul.addr %s480, 4
        %s484 = sadd.s32 %s482, %s483
        %s485 = smul.addr %s484, 8
        %s486 = scalar_lea.vmem %s8, %s485
        %v487 = vld [vmem:[%s448] sm:$0xff]
        %v488 = vmul.f32 %v487, 0.17677669
        %v489 = vld [vmem:[%s457] sm:$0xff]
        %v490 = vld [vmem:[%s457 + $0x8] sm:$0xff]
        %v491 = vld [vmem:[%s457 + $0x10] sm:$0xff]
        %v492 = vld [vmem:[%s457 + $0x18] sm:$0xff]
        %v493 = vld [vmem:[%s457 + $0x20] sm:$0xff]
        %v494 = vld [vmem:[%s457 + $0x28] sm:$0xff]
        %v495 = vld [vmem:[%s457 + $0x30] sm:$0xff]
        %v496 = vld [vmem:[%s457 + $0x38] sm:$0xff]
        %v497 = vld [vmem:[%s457 + $0x40] sm:$0xff]
        %v498 = vld [vmem:[%s457 + $0x48] sm:$0xff]
        %v499 = vld [vmem:[%s457 + $0x50] sm:$0xff]
        %v500 = vld [vmem:[%s457 + $0x58] sm:$0xff]
        %v501 = vld [vmem:[%s457 + $0x60] sm:$0xff]
        %v502 = vld [vmem:[%s457 + $0x68] sm:$0xff]
        %v503 = vld [vmem:[%s457 + $0x70] sm:$0xff]
        %v504 = vld [vmem:[%s457 + $0x78] sm:$0xff]
        %v505 = vld [vmem:[%s466] sm:$0xff]
        %v506 = vld [vmem:[%s466 + $0x8] sm:$0xff]
        %v507 = vld [vmem:[%s466 + $0x10] sm:$0xff]
        %v508 = vld [vmem:[%s466 + $0x18] sm:$0xff]
        %v509 = vld [vmem:[%s466 + $0x20] sm:$0xff]
        %v510 = vld [vmem:[%s466 + $0x28] sm:$0xff]
        %v511 = vld [vmem:[%s466 + $0x30] sm:$0xff]
        %v512 = vld [vmem:[%s466 + $0x38] sm:$0xff]
        %v513 = vld [vmem:[%s466 + $0x40] sm:$0xff]
        %v514 = vld [vmem:[%s466 + $0x48] sm:$0xff]
        %v515 = vld [vmem:[%s466 + $0x50] sm:$0xff]
        %v516 = vld [vmem:[%s466 + $0x58] sm:$0xff]
        %v517 = vld [vmem:[%s466 + $0x60] sm:$0xff]
        %v518 = vld [vmem:[%s466 + $0x68] sm:$0xff]
        %v519 = vld [vmem:[%s466 + $0x70] sm:$0xff]
        %v520 = vld [vmem:[%s466 + $0x78] sm:$0xff]
        %v521 = vld [vmem:[%s478] sm:$0xff]
        %vm522 = vcmask 261120
        %v524 = vsel %vm522, %v488, 0
        %v527 = vsel %vm522, %v489, 0
        %v530 = vsel %vm522, %v490, 0
        %v533 = vsel %vm522, %v491, 0
        %v536 = vsel %vm522, %v492, 0
        %v539 = vsel %vm522, %v493, 0
        %v542 = vsel %vm522, %v494, 0
        %v545 = vsel %vm522, %v495, 0
        %v548 = vsel %vm522, %v496, 0
        %v551 = vsel %vm522, %v497, 0
        %v554 = vsel %vm522, %v498, 0
        %v557 = vsel %vm522, %v499, 0
        %v560 = vsel %vm522, %v500, 0
        %v563 = vsel %vm522, %v501, 0
        %v566 = vsel %vm522, %v502, 0
        %v569 = vsel %vm522, %v503, 0
        %v572 = vsel %vm522, %v504, 0
        %574 = vmatprep.subr.mxu0 0.0
        %575 = vmatpush1.xpose.msra.mxu0 %v527
        %576 = vmatprep.subr.mxu0 0.0
        %577 = vmatpush1.xpose.msra.mxu0 %v530
        %578 = vmatprep.subr.mxu0 0.0
        %579 = vmatpush1.xpose.msra.mxu0 %v533
        %580 = vmatprep.subr.mxu0 0.0
        %581 = vmatpush1.xpose.msra.mxu0 %v536
        %582 = vmatprep.subr.mxu0 0.0
        %583 = vmatpush1.xpose.msra.mxu0 %v539
        %584 = vmatprep.subr.mxu0 0.0
        %585 = vmatpush1.xpose.msra.mxu0 %v542
        %586 = vmatprep.subr.mxu0 0.0
        %587 = vmatpush1.xpose.msra.mxu0 %v545
        %588 = vmatprep.subr.mxu0 0.0
        %589 = vmatpush1.xpose.msra.mxu0 %v548
        %590 = vmatprep.subr.mxu0 0.0
        %591 = vmatpush1.xpose.msra.mxu0 %v551
        %592 = vmatprep.subr.mxu0 0.0
        %593 = vmatpush1.xpose.msra.mxu0 %v554
        %594 = vmatprep.subr.mxu0 0.0
        %595 = vmatpush1.xpose.msra.mxu0 %v557
        %596 = vmatprep.subr.mxu0 0.0
        %597 = vmatpush1.xpose.msra.mxu0 %v560
        %598 = vmatprep.subr.mxu0 0.0
        %599 = vmatpush1.xpose.msra.mxu0 %v563
        %600 = vmatprep.subr.mxu0 0.0
        %601 = vmatpush1.xpose.msra.mxu0 %v566
        %602 = vmatprep.subr.mxu0 0.0
        %603 = vmatpush1.xpose.msra.mxu0 %v569
        %604 = vmatprep.subr.mxu0 0.0
        %605 = vmatpush1.xpose.msra.mxu0 %v572
        %606 = vmatprep.subr.mxu0 0.0
        %607 = vmatpush1.xpose.msra.mxu0 0.0
        %608 = vmatprep.subr.mxu0 0.0
        %609 = vmatpush1.xpose.msra.mxu0 0.0
        %610 = vmatprep.subr.mxu0 0.0
        %611 = vmatpush1.xpose.msra.mxu0 0.0
        %612 = vmatprep.subr.mxu0 0.0
        %613 = vmatpush1.xpose.msra.mxu0 0.0
        %614 = vmatprep.subr.mxu0 0.0
        %615 = vmatpush1.xpose.msra.mxu0 0.0
        %616 = vmatprep.subr.mxu0 0.0
        %617 = vmatpush1.xpose.msra.mxu0 0.0
        %618 = vmatprep.subr.mxu0 0.0
        %619 = vmatpush1.xpose.msra.mxu0 0.0
        %620 = vmatprep.subr.mxu0 0.0
        %621 = vmatpush1.xpose.msra.mxu0 0.0
        %622 = vmatprep.subr.mxu0 0.0
        %623 = vmatpush1.xpose.msra.mxu0 0.0
        %624 = vmatprep.subr.mxu0 0.0
        %625 = vmatpush1.xpose.msra.mxu0 0.0
        %626 = vmatprep.subr.mxu0 0.0
        %627 = vmatpush1.xpose.msra.mxu0 0.0
        %628 = vmatprep.subr.mxu0 0.0
        %629 = vmatpush1.xpose.msra.mxu0 0.0
        %630 = vmatprep.subr.mxu0 0.0
        %631 = vmatpush1.xpose.msra.mxu0 0.0
        %632 = vmatprep.subr.mxu0 0.0
        %633 = vmatpush1.xpose.msra.mxu0 0.0
        %634 = vmatprep.subr.mxu0 0.0
        %635 = vmatpush1.xpose.msra.mxu0 0.0
        %636 = vmatprep.subr.mxu0 0.0
        %637 = vmatpush1.xpose.msra.mxu0 0.0
        %638 = vmatprep.mubr.f32.mxu0 0.0
        %639 = vmatmul.mubr.f32.gmra.mrb[0].mxu0 %v524
        %v640 = vpop.f32.mrb[0].mxu0
        %v641 = vadd.f32 0.0, %v640
        %v642 = vpop.f32.mrb[0].mxu0
        %643 = vdwg.mxu0
        %vm644 = vcmp.gt.f32.partialorder %v521, 0.5
        %v645 = vsel %vm644, -inf, %v641
        %646 = vmax.xlane.f32.xlu0 %v645
        %v647 = vpop.xlane.xlu0 %646
        %v648 = vsub.f32 %v645, %v647
        %v649 = vmul.f32 %v648, 1.442695
        %v650 = vpow.pop %v649
        %651 = vadd.xlane.f32.xlu0 %v650
        %v652 = vpop.xlane.xlu0 %651
        %v653 = vrcp.pop %v652
        %v654 = vmul.f32 1.0, %v653
        %v655 = vmul.f32 %v650, %v654
        %656 = vmatprep.subr.mxu0 0.0
        %657 = vmatpush1.msra.mxu0 %v505
        %658 = vmatprep.subr.mxu0 0.0
        %659 = vmatpush1.msra.mxu0 %v506
        %660 = vmatprep.subr.mxu0 0.0
        %661 = vmatpush1.msra.mxu0 %v507
        %662 = vmatprep.subr.mxu0 0.0
        %663 = vmatpush1.msra.mxu0 %v508
        %664 = vmatprep.subr.mxu0 0.0
        %665 = vmatpush1.msra.mxu0 %v509
        %666 = vmatprep.subr.mxu0 0.0
        %667 = vmatpush1.msra.mxu0 %v510
        %668 = vmatprep.subr.mxu0 0.0
        %669 = vmatpush1.msra.mxu0 %v511
        %670 = vmatprep.subr.mxu0 0.0
        %671 = vmatpush1.msra.mxu0 %v512
        %672 = vmatprep.subr.mxu0 0.0
        %673 = vmatpush1.msra.mxu0 %v513
        %674 = vmatprep.subr.mxu0 0.0
        %675 = vmatpush1.msra.mxu0 %v514
        %676 = vmatprep.subr.mxu0 0.0
        %677 = vmatpush1.msra.mxu0 %v515
        %678 = vmatprep.subr.mxu0 0.0
        %679 = vmatpush1.msra.mxu0 %v516
        %680 = vmatprep.subr.mxu0 0.0
        %681 = vmatpush1.msra.mxu0 %v517
        %682 = vmatprep.subr.mxu0 0.0
        %683 = vmatpush1.msra.mxu0 %v518
        %684 = vmatprep.subr.mxu0 0.0
        %685 = vmatpush1.msra.mxu0 %v519
        %686 = vmatprep.subr.mxu0 0.0
        %687 = vmatpush1.msra.mxu0 %v520
        %688 = vmatprep.subr.mxu0 0.0
        %689 = vmatpush1.msra.mxu0 0.0
        %690 = vmatprep.subr.mxu0 0.0
        %691 = vmatpush1.msra.mxu0 0.0
        %692 = vmatprep.subr.mxu0 0.0
        %693 = vmatpush1.msra.mxu0 0.0
        %694 = vmatprep.subr.mxu0 0.0
        %695 = vmatpush1.msra.mxu0 0.0
        %696 = vmatprep.subr.mxu0 0.0
        %697 = vmatpush1.msra.mxu0 0.0
        %698 = vmatprep.subr.mxu0 0.0
        %699 = vmatpush1.msra.mxu0 0.0
        %700 = vmatprep.subr.mxu0 0.0
        %701 = vmatpush1.msra.mxu0 0.0
        %702 = vmatprep.subr.mxu0 0.0
        %703 = vmatpush1.msra.mxu0 0.0
        %704 = vmatprep.subr.mxu0 0.0
        %705 = vmatpush1.msra.mxu0 0.0
        %706 = vmatprep.subr.mxu0 0.0
        %707 = vmatpush1.msra.mxu0 0.0
        %708 = vmatprep.subr.mxu0 0.0
        %709 = vmatpush1.msra.mxu0 0.0
        %710 = vmatprep.subr.mxu0 0.0
        %711 = vmatpush1.msra.mxu0 0.0
        %712 = vmatprep.subr.mxu0 0.0
        %713 = vmatpush1.msra.mxu0 0.0
        %714 = vmatprep.subr.mxu0 0.0
        %715 = vmatpush1.msra.mxu0 0.0
        %716 = vmatprep.subr.mxu0 0.0
        %717 = vmatpush1.msra.mxu0 0.0
        %718 = vmatprep.subr.mxu0 0.0
        %719 = vmatpush1.msra.mxu0 0.0
        %720 = vmatprep.mubr.f32.mxu0 0.0
        %721 = vmatmul.mubr.f32.gmra.mrb[0].mxu0 %v655
        %v722 = vpop.f32.mrb[0].mxu0
        %v723 = vadd.f32 0.0, %v722
        %v724 = vpop.f32.mrb[0].mxu0
        %725 = vdwg.mxu0
        %726 = vst.msk [vmem:[%s416] sm:$0xff] %vm522, %v723
        %727 = vst [vmem:[%s423] sm:$0xff] %v655
        %v728 = vld [vmem:[%s474] sm:$0xff]
        %v729 = vmul.f32 %v728, 5.0
        %v730 = vxor.u32 %v729, 2147483648
        %v731 = vmul.f32 %v730, 1.442695
        %v732 = vpow.pop %v731
        %v733 = vadd.f32 %v732, 1.0
        %v734 = vrcp.pop %v733
        %v735 = vmul.f32 1.0, %v734
        %v736 = vadd.f32 %v735, 1e-05
        %v737 = vmul.f32 %v736, 1.0986123
        %v738 = vmul.f32 %v737, 1.442695
        %v739 = vpow.pop %v738
        %v740 = vsub.f32 %v739, 1.0
        %vm741 = vcmask 7168
        %742 = vst.msk [vmem:[%s486] sm:$0xff] %vm741, %v740
        %v743 = vlaneseq
        %v744 = vshrl.u32 %v743, 7
        %v745 = vlaneseq
        %v746 = vand.u32 %v745, 127
        %v747 = vsub.s32 %v744, %v746
        %vm748 = vcmp.lt.s32.totalorder %v747, 0
        %v749 = vsub.s32 0, %v747
        %v750 = vsel %vm748, %v749, %v747
        %v751 = vcvt.s32.f32 %v750
        %v752 = vrcp.pop %v740
        %v753 = vmul.f32 1.0, %v752
        %v754 = vmul.f32 %v753, 0.3989423
        %v755 = vmul.f32 %v751, %v751
        %v756 = vsub.f32 0.0, %v755
        %v757 = vmul.f32 %v753, %v753
        %v758 = vmul.f32 %v757, 0.5
        %760 = vset.pattern.permute.xlu0 0
        %761 = vperm.xlu0 %760, %v758
        %v762 = vpop.permute.xlu0 %761
        %v764 = vmul.f32 %v756, %v762
        %v765 = vmul.f32 %v764, 1.442695
        %v766 = vpow.pop %v765
        %768 = vset.pattern.permute.xlu0 0
        %769 = vperm.xlu0 %768, %v754
        %v770 = vpop.permute.xlu0 %769
        %v772 = vmul.f32 %v770, %v766
        %773 = vst [vmem:[%s430] sm:$0xff] %v772
        %s774 = sand.u32 %s186, 1
        %s775 = scalar_lea.sflag [#allocation3], %s774
        %s776 = sand.u32 %s186, 1
        %s777 = smul.addr %s776, 8
        %s778 = scalar_lea.vmem [#allocation2], %s777
        %s779 = sand.u32 %s26, 1
        %s780 = scalar_lea.sflag [#allocation5], %s779
        %s781 = sand.u32 %s214, 1
        %s782 = smul.addr %s781, 8
        %s783 = scalar_lea.vmem [#allocation4], %s782
        %s784 = sand.u32 %s26, 1
        %s785 = scalar_lea.sflag [#allocation5], %s784
        %s786 = sand.u32 %s242, 1
        %s787 = smul.addr %s786, 8
        %s788 = scalar_lea.vmem [#allocation6], %s787
        %p789 = scmp.lt.s32.totalorder %s30, 1
        %s790 = scalar_select %p789, %s30, 1
        %p791 = scmp.lt.s32.totalorder %s31, 3
        %s792 = scalar_select %p791, %s31, 3
        %s793 = smul.addr %s790, 4
        %s794 = sadd.s32 %s792, %s793
        %s795 = smul.addr %s794, 8
        %s796 = scalar_lea.vmem %s8, %s795
        // Predicated region
        $region41: #{tpu_custom_call.1} parent=39 // pred_check
          %p797 = pneg %p196
        $region42: #{tpu_custom_call.1} parent=39 // pred_check_branch
          %799 = sbr.rel (%p797) target = $region44
        $region43: #{tpu_custom_call.1} parent=39 // pred_region
          %s801 = ssub.s32 128, 128
          %802 = vsyncadd %s775, %s801
          %s803 = smul.addr %s30, 4
          %s804 = sadd.s32 %s31, %s803
          %s805 = smul.addr %s804, 128
          %s806 = scalar_lea.hbm %s5, %s805
          %s808 = sshll.u32 %s778, 4
          %s809 = int_to_ptr.vmem [resolvable:$true] %s808
          %811 = dma.vmem_to_hbm [thread:$0]  %s809, 128, %s806, %s775
        $region44: #{tpu_custom_call.1} parent=39 // pred_fallthru
          _
        // Predicated region
        $region45: #{tpu_custom_call.1} parent=39 // pred_check
          %p812 = pneg %p224
        $region46: #{tpu_custom_call.1} parent=39 // pred_check_branch
          %814 = sbr.rel (%p812) target = $region48
        $region47: #{tpu_custom_call.1} parent=39 // pred_region
          %s816 = ssub.s32 128, 128
          %817 = vsyncadd %s780, %s816
          %s818 = smul.addr %s30, 4
          %s819 = sadd.s32 %s31, %s818
          %s820 = smul.addr %s819, 128
          %s821 = scalar_lea.hbm %s6, %s820
          %s823 = sshll.u32 %s783, 4
          %s824 = int_to_ptr.vmem [resolvable:$true] %s823
          %826 = dma.vmem_to_hbm [thread:$0]  %s824, 128, %s821, %s780
        $region48: #{tpu_custom_call.1} parent=39 // pred_fallthru
          _
        // Predicated region
        $region49: #{tpu_custom_call.1} parent=39 // pred_check
          %p827 = pneg %p252
        $region50: #{tpu_custom_call.1} parent=39 // pred_check_branch
          %829 = sbr.rel (%p827) target = $region52
        $region51: #{tpu_custom_call.1} parent=39 // pred_region
          %s831 = ssub.s32 128, 128
          %832 = vsyncadd %s785, %s831
          %s833 = smul.addr %s30, 4
          %s834 = sadd.s32 %s31, %s833
          %s835 = smul.addr %s834, 128
          %s836 = scalar_lea.hbm %s7, %s835
          %s838 = sshll.u32 %s788, 4
          %s839 = int_to_ptr.vmem [resolvable:$true] %s838
          %841 = dma.vmem_to_hbm [thread:$0]  %s839, 128, %s836, %s785
        $region52: #{tpu_custom_call.1} parent=39 // pred_fallthru
          _
        // Predicated region
        $region53: #{tpu_custom_call.1} parent=39 // pred_check
          %p842 = pneg %p280
        $region54: #{tpu_custom_call.1} parent=39 // pred_check_branch
          %844 = sbr.rel (%p842) target = $region56
        $region55: #{tpu_custom_call.1} parent=39 // pred_region
          _
        $region56: #{tpu_custom_call.1} parent=39 // pred_fallthru
          _
      $region40: #{tpu_custom_call.1} parent=5 // pred_fallthru
        _
      %p845 = scmp.le.s32.totalorder 2, %s21
      // Predicated region
      $region57: #{tpu_custom_call.1} parent=5 // pred_check
        %p846 = pneg %p845
      $region58: #{tpu_custom_call.1} parent=5 // pred_check_branch
        %848 = sbr.rel (%p846) target = $region60
      $region59: #{tpu_custom_call.1} parent=5 // pred_region
        %s849 = ssub.s32 %s21, 2
        // Predicated region
        $region61: #{tpu_custom_call.1} parent=59 // pred_check
          %p850 = pneg %p202
        $region62: #{tpu_custom_call.1} parent=59 // pred_check_branch
          %852 = sbr.rel (%p850) target = $region64
        $region63: #{tpu_custom_call.1} parent=59 // pred_region
          %s853 = sand.u32 %s187, 1
          %s854 = scalar_lea.sflag [#allocation3], %s853
          %s855 = sand.u32 %s187, 1
          %s856 = smul.addr %s855, 8
          %s857 = scalar_lea.vmem [#allocation2], %s856
          %858 = dma.done %s854, 128
        $region64: #{tpu_custom_call.1} parent=59 // pred_fallthru
          _
        // Predicated region
        $region65: #{tpu_custom_call.1} parent=59 // pred_check
          %p859 = pneg %p230
        $region66: #{tpu_custom_call.1} parent=59 // pred_check_branch
          %861 = sbr.rel (%p859) target = $region68
        $region67: #{tpu_custom_call.1} parent=59 // pred_region
          %s862 = sand.u32 %s27, 1
          %s863 = scalar_lea.sflag [#allocation5], %s862
          %s864 = sand.u32 %s215, 1
          %s865 = smul.addr %s864, 8
          %s866 = scalar_lea.vmem [#allocation4], %s865
          %867 = dma.done %s863, 128
        $region68: #{tpu_custom_call.1} parent=59 // pred_fallthru
          _
        // Predicated region
        $region69: #{tpu_custom_call.1} parent=59 // pred_check
          %p868 = pneg %p258
        $region70: #{tpu_custom_call.1} parent=59 // pred_check_branch
          %870 = sbr.rel (%p868) target = $region72
        $region71: #{tpu_custom_call.1} parent=59 // pred_region
          %s871 = sand.u32 %s27, 1
          %s872 = scalar_lea.sflag [#allocation5], %s871
          %s873 = sand.u32 %s243, 1
          %s874 = smul.addr %s873, 8
          %s875 = scalar_lea.vmem [#allocation6], %s874
          %876 = dma.done %s872, 128
        $region72: #{tpu_custom_call.1} parent=59 // pred_fallthru
          _
        // Predicated region
        $region73: #{tpu_custom_call.1} parent=59 // pred_check
          %p877 = pneg %p286
        $region74: #{tpu_custom_call.1} parent=59 // pred_check_branch
          %879 = sbr.rel (%p877) target = $region76
        $region75: #{tpu_custom_call.1} parent=59 // pred_region
          %p880 = scmp.lt.s32.totalorder %s32, 1
          %s881 = scalar_select %p880, %s32, 1
          %p882 = scmp.lt.s32.totalorder %s33, 3
          %s883 = scalar_select %p882, %s33, 3
          %s884 = smul.addr %s881, 4
          %s885 = sadd.s32 %s883, %s884
          %s886 = smul.addr %s885, 8
          %s887 = scalar_lea.vmem %s8, %s886
        $region76: #{tpu_custom_call.1} parent=59 // pred_fallthru
          _
      $region60: #{tpu_custom_call.1} parent=5 // pred_fallthru
        _
    $region6: #{tpu_custom_call.1} parent=1 // loop_footer
      %s25 = sadd.s32 1, %s21
    $region7: #{tpu_custom_call.1} parent=1 // loop_footer_branch
      %20 = sbr.rel target = $region3
    $region8: #{tpu_custom_call.1} parent=1 // loop_exit
      _
    %888 = vsyncpa [#allocation3], 1
    %s889 = scalar_lea.sflag [#allocation3], 1
    %890 = vsyncpa %s889, 1
    %891 = vsyncpa [#allocation5], 1
    %s892 = scalar_lea.sflag [#allocation5], 1
    %893 = vsyncpa %s892, 1

</llo_original>
